<compile_context>
chip_gen: v7x
topology: tpu7x:2x2x1
jax: 0.10.0
libtpu: 0.0.40
codegen_flags: <defaults>
</compile_context>

<pallas_src>
from functools import partial

import jax
import jax.numpy as jnp
from jax.experimental import pallas as pl
from jax.experimental.pallas import tpu as pltpu

LANE = 128


def _round_up(x, m):
    return (x + m - 1) // m * m


def _vmem_budget():
    """(vmem_limit_bytes, per-step tile budget) derived from the chip's physical VMEM."""
    try:
        cap = pltpu.get_tpu_info().vmem_capacity_bytes
    except Exception:
        cap = 64 * 1024 * 1024                      # conservative fallback (v7x per-TC VMEM)
    limit = min(int(cap * 0.75), 100 * 1024 * 1024)  # ~48 MiB on v7x, ~96 MiB on v5e/v6e
    return limit, int(limit * 0.7)


def _choose_tile_h(H, W, dh, dw, c_last, cout_p, n_taps, n_imgs, budget):
    """Largest divisor of H whose per-grid-step VMEM working set fits `budget`."""
    best = 1
    for th in range(1, H + 1):
        if H % th:
            continue
        in_b = 2 * (th + dh) * (W + dw) * c_last * 2    # bf16 input block, double buffered
        out_b = 2 * th * W * cout_p * 2                 # bf16 conv-out block, double buffered
        stat_b = 2 * 2 * cout_p * 4                     # stats block
        w_b = 2 * n_taps * c_last * cout_p * 2          # resident weights (count both buffers)
        acc_b = th * W * cout_p * 4                     # f32 accumulator
        tap_b = 2 * th * W * c_last * 2                 # tap-slice / relayout slop
        if in_b + out_b + stat_b + w_b + acc_b + tap_b <= budget:
            best = th
    # Keep at least 2 grid steps so both v7x TensorCores get work.
    if n_imgs * (H // best) < 2:
        divisors = [t for t in range(1, H) if H % t == 0 and H // t >= 2]
        if divisors:
            best = max(divisors)
    return best


def _pick_row_tile(total, cap=1024):
    """Largest lane-dense row tile (multiple of 8 or the whole thing) dividing `total`."""
    cap = min(cap, total)
    for t in range(cap, 0, -1):
        if total % t == 0 and (t % 8 == 0 or t == total):
            return t
    return total


def _conv_stats_kernel(x_ref, w_ref, o_ref, stat_ref, *, TH, W, taps, c_last):
    """3x3 conv tile as per-tap MXU matmuls accumulated in f32 + partial BN statistics."""
    acc = None
    for t, (kh, kw) in enumerate(taps):
        tap = x_ref[0, kh:kh + TH, kw:kw + W, :].reshape(TH * W, c_last)
        prod = jnp.dot(tap, w_ref[t], preferred_element_type=jnp.float32)
        acc = prod if acc is None else acc + prod
    o_ref[0] = acc.reshape(TH, W, acc.shape[-1]).astype(o_ref.dtype)
    s = jnp.sum(acc, axis=0, keepdims=True)             # (1, Cout_p) partial sum
    sq = jnp.sum(acc * acc, axis=0, keepdims=True)      # (1, Cout_p) partial sum of squares
    stat_ref[0] = jnp.concatenate([s, sq], axis=0)


def _bn_apply_kernel(x_ref, scale_ref, shift_ref, o_ref):
    """Per-channel affine y = x*scale + shift, f32 math, bf16 in/out, lane-dense, in place."""
    y = x_ref[...].astype(jnp.float32) * scale_ref[...] + shift_ref[...]
    o_ref[...] = y.astype(o_ref.dtype)


def conv_block(x_nchw, w_oihw, bias, gamma, beta, eps=1e-5):
    # NOTE: `bias` is intentionally unused - a per-channel conv bias shifts the batch mean by
    # the same constant, so training-mode BatchNorm cancels it exactly.  This assumption only
    # holds because the conv output is consumed by batch-stats BN immediately (as in the module).
    del bias
    N, Cin, H, W = x_nchw.shape
    Cout = w_oihw.shape[0]
    Cout_p = _round_up(Cout, LANE)
    vmem_limit, budget = _vmem_budget()

    # ---- wrapper glue: layout conversion, K packing, bf16 for the MXU ----
    x = jnp.transpose(x_nchw, (0, 2, 3, 1))                             # NHWC
    w = jnp.transpose(w_oihw, (2, 3, 1, 0))                             # (3, 3, Cin, Cout)

    small_k = 9 * Cin <= LANE
    if small_k:
        # Fold the whole 3x3 patch into the lane dim: K = 9*Cin -> K_p (=128 for Cin<=14).
        K_p = _round_up(9 * Cin, LANE)
        x_pad = jnp.pad(x, ((0, 0), (1, 1), (1, 1), (0, 0)))            # (N, H+2, W+2, Cin)
        patches = [x_pad[:, kh:kh + H, kw:kw + W, :]
                   for kh in range(3) for kw in range(3)]
        xk = jnp.concatenate(patches, axis=-1)                          # (N, H, W, 9*Cin)
        xk = jnp.pad(xk, ((0, 0), (0, 0), (0, 0), (0, K_p - 9 * Cin))).astype(jnp.bfloat16)
        w_k = jnp.pad(w.reshape(9 * Cin, Cout),
                      ((0, K_p - 9 * Cin), (0, Cout_p - Cout)))
        w_k = w_k.astype(jnp.bfloat16).reshape(1, K_p, Cout_p)
        taps, c_last, dh, dw = ((0, 0),), K_p, 0, 0
    else:
        # Lane-dense NHWC with Cin padded to 128; 9 per-tap matmuls in the kernel.
        Cin_p = _round_up(Cin, LANE)
        xk = jnp.pad(x, ((0, 0), (1, 1), (1, 1), (0, Cin_p - Cin))).astype(jnp.bfloat16)
        w_k = jnp.pad(w, ((0, 0), (0, 0), (0, Cin_p - Cin), (0, Cout_p - Cout)))
        w_k = w_k.astype(jnp.bfloat16).reshape(9, Cin_p, Cout_p)
        taps = tuple((kh, kw) for kh in range(3) for kw in range(3))
        c_last, dh, dw = Cin_p, 2, 2

    TH = _choose_tile_h(H, W, dh, dw, c_last, Cout_p, len(taps), N, budget)
    R = H // TH
    NR = N * R

    if small_k:
        x_tiles = xk.reshape(NR, TH, W, c_last)                         # no halo needed
    else:
        # One (TH+2)-row overlapping window per row tile: halo written once (~1.1x), not 3x.
        x_tiles = jnp.stack([xk[:, r * TH:r * TH + TH + 2] for r in range(R)], axis=1)
        x_tiles = x_tiles.reshape(NR, TH + 2, W + 2, c_last)

    conv_out, stats = pl.pallas_call(
        partial(_conv_stats_kernel, TH=TH, W=W, taps=taps, c_last=c_last),
        out_shape=(jax.ShapeDtypeStruct((NR, TH, W, Cout_p), jnp.bfloat16),
                   jax.ShapeDtypeStruct((NR, 2, Cout_p), jnp.float32)),
        grid=(NR,),
        in_specs=[
            pl.BlockSpec((1, TH + dh, W + dw, c_last), lambda i: (i, 0, 0, 0)),
            pl.BlockSpec((len(taps), c_last, Cout_p), lambda i: (0, 0, 0)),   # resident weights
        ],
        out_specs=(
            pl.BlockSpec((1, TH, W, Cout_p), lambda i: (i, 0, 0, 0)),
            pl.BlockSpec((1, 2, Cout_p), lambda i: (i, 0, 0)),
        ),
        compiler_params=pltpu.CompilerParams(
            dimension_semantics=("parallel",),
            vmem_limit_bytes=vmem_limit),
    )(x_tiles, w_k)

    # ---- tiny per-channel scalar math (glue): reduce partial stats, fold BN into scale/shift ----
    count = float(N * H * W)
    csum = jnp.sum(stats[:, 0, :], axis=0)                              # (Cout_p,)
    cssq = jnp.sum(stats[:, 1, :], axis=0)
    mean = csum / count
    # TODO(synk): E[x^2]-E[x]^2 in f32 can cancel for large-mean activations; a shifted or
    # two-pass variance would be safer for very deep nets.
    var = cssq / count - mean * mean                                    # biased var (PyTorch BN)
    gamma_p = jnp.pad(gamma.astype(jnp.float32), (0, Cout_p - Cout))
    beta_p = jnp.pad(beta.astype(jnp.float32), (0, Cout_p - Cout))
    scale_v = gamma_p * jax.lax.rsqrt(var + eps)
    shift_v = beta_p - mean * scale_v
    scale = scale_v.reshape(1, Cout_p)
    shift = shift_v.reshape(1, Cout_p)

    # ---- BN apply: lane-dense bf16 FMA, row tile decoupled from TH, written in place ----
    rows = N * H * W
    conv_flat = conv_out.reshape(rows, Cout_p)
    TR = _pick_row_tile(rows)
    y = pl.pallas_call(
        _bn_apply_kernel,
        out_shape=jax.ShapeDtypeStruct((rows, Cout_p), jnp.bfloat16),
        grid=(rows // TR,),
        in_specs=[
            pl.BlockSpec((TR, Cout_p), lambda i: (i, 0)),
            pl.BlockSpec((1, Cout_p), lambda i: (0, 0)),
            pl.BlockSpec((1, Cout_p), lambda i: (0, 0)),
        ],
        out_specs=pl.BlockSpec((TR, Cout_p), lambda i: (i, 0)),
        input_output_aliases={0: 0},
        compiler_params=pltpu.CompilerParams(
            dimension_semantics=("parallel",),
            vmem_limit_bytes=vmem_limit),
    )(conv_flat, scale, shift)

    y = y.reshape(N, H, W, Cout_p)[..., :Cout].astype(jnp.float32)
    return jnp.transpose(y, (0, 3, 1, 2))                               # back to NCHW


def _reference(x, w, b, gamma, beta, eps=1e-5):
    y = jax.lax.conv_general_dilated(
        x, w, (1, 1), [(1, 1), (1, 1)],
        dimension_numbers=("NCHW", "OIHW", "NCHW")) + b.reshape(1, -1, 1, 1)
    mean = jnp.mean(y, axis=(0, 2, 3), keepdims=True)
    var = jnp.var(y, axis=(0, 2, 3), keepdims=True)
    return ((y - mean) * jax.lax.rsqrt(var + eps) * gamma.reshape(1, -1, 1, 1)
            + beta.reshape(1, -1, 1, 1))


if __name__ == "__main__":
    N, Cin, Cout, H, W = 2, 4, 8, 16, 16

    key = jax.random.PRNGKey(0)
    kx, kw, kb = jax.random.split(key, 3)
    x = jax.random.normal(kx, (N, Cin, H, W), dtype=jnp.float32)
    # Conv2d params: weight (Cout, Cin, 3, 3), bias (Cout,).
    w = jax.random.normal(kw, (Cout, Cin, 3, 3), dtype=jnp.float32) * 0.1
    b = jax.random.normal(kb, (Cout,), dtype=jnp.float32) * 0.1
    # BatchNorm2d init: gamma=1, beta=0 (training-mode forward uses batch statistics).
    gamma = jnp.ones((Cout,), jnp.float32)
    beta = jnp.zeros((Cout,), jnp.float32)

    fn = jax.jit(conv_block)
    out = fn(x, w, b, gamma, beta)
    out = jax.block_until_ready(out)

    ref = _reference(x, w, b, gamma, beta)
    assert out.shape == (N, Cout, H, W)
    # Tolerance reflects bf16 MXU inputs / bf16 activation storage vs the all-f32 reference.
    assert jnp.allclose(out, ref, atol=3e-2, rtol=3e-2)
    print("KERNEL_OK")
</pallas_src>

<mosaic_0001>
module attributes {stable_mosaic.version = 11 : i64} {
  func.func @_conv_stats_kernel(%arg0: i32, %arg1: memref<1x16x16x128xbf16, #tpu.memory_space<vmem>>, %arg2: memref<1x128x128xbf16, #tpu.memory_space<vmem>>, %arg3: memref<1x16x16x128xbf16, #tpu.memory_space<vmem>>, %arg4: memref<1x2x128xf32, #tpu.memory_space<vmem>>) attributes {dimension_semantics = [#tpu.dimension_semantics<parallel>], iteration_bounds = array<i64: 2>, scalar_prefetch = 0 : i64, scratch_operands = 0 : i64, tpu.core_type = #tpu.core_type<tc>, window_params = [{transform_indices = @transform_0, window_bounds = array<i64: 1, 16, 16, 128>}, {pipeline_mode = #tpu.pipeline_mode<synchronous>, transform_indices = @transform_1, window_bounds = array<i64: 1, 128, 128>}, {transform_indices = @transform_2, window_bounds = array<i64: 1, 16, 16, 128>}, {transform_indices = @transform_3, window_bounds = array<i64: 1, 2, 128>}]} {
    %c0 = arith.constant 0 : index
    %c0_0 = arith.constant 0 : index
    %c0_1 = arith.constant 0 : index
    %c0_2 = arith.constant 0 : index
    %0 = vector.load %arg1[%c0, %c0_0, %c0_1, %c0_2] : memref<1x16x16x128xbf16, #tpu.memory_space<vmem>>, vector<1x16x16x128xbf16>
    %1 = vector.shape_cast %0 : vector<1x16x16x128xbf16> to vector<16x16x128xbf16>
    %2 = vector.shape_cast %1 : vector<16x16x128xbf16> to vector<256x128xbf16>
    %c0_3 = arith.constant 0 : index
    %c0_4 = arith.constant 0 : index
    %c0_5 = arith.constant 0 : index
    %3 = vector.load %arg2[%c0_3, %c0_4, %c0_5] : memref<1x128x128xbf16, #tpu.memory_space<vmem>>, vector<1x128x128xbf16>
    %4 = vector.shape_cast %3 : vector<1x128x128xbf16> to vector<128x128xbf16>
    %cst = arith.constant dense<0.000000e+00> : vector<256x128xf32>
    %5 = tpu.matmul %2, %4, %cst {dimension_numbers = #tpu.dot_dimension_numbers<[1], [0], [0], [1], [0, 0, 1, 1], [], []>} : vector<256x128xbf16>, vector<128x128xbf16>, vector<256x128xf32> -> vector<256x128xf32>
    %6 = vector.shape_cast %5 : vector<256x128xf32> to vector<16x16x128xf32>
    %7 = arith.truncf %6 : vector<16x16x128xf32> to vector<16x16x128xbf16>
    %c0_6 = arith.constant 0 : index
    %c0_7 = arith.constant 0 : index
    %c0_8 = arith.constant 0 : index
    %c0_9 = arith.constant 0 : index
    %8 = vector.load %arg3[%c0_6, %c0_7, %c0_8, %c0_9] : memref<1x16x16x128xbf16, #tpu.memory_space<vmem>>, vector<1x16x16x128xbf16>
    %9 = vector.shape_cast %8 : vector<1x16x16x128xbf16> to vector<16x16x128xbf16>
    %10 = vector.shape_cast %7 : vector<16x16x128xbf16> to vector<1x16x16x128xbf16>
    tpu.vector_store %arg3[%c0_6, %c0_7, %c0_8, %c0_9], %10 {strides = array<i32>} : memref<1x16x16x128xbf16, #tpu.memory_space<vmem>>, vector<1x16x16x128xbf16>,
    %cst_10 = arith.constant dense<0.000000e+00> : vector<128xf32>
    %11 = vector.multi_reduction <add>, %5, %cst_10 [0] : vector<256x128xf32> to vector<128xf32>
    %12 = vector.shape_cast %11 : vector<128xf32> to vector<1x128xf32>
    %13 = arith.mulf %5, %5 : vector<256x128xf32>
    %cst_11 = arith.constant dense<0.000000e+00> : vector<128xf32>
    %14 = vector.multi_reduction <add>, %13, %cst_11 [0] : vector<256x128xf32> to vector<128xf32>
    %15 = vector.shape_cast %14 : vector<128xf32> to vector<1x128xf32>
    %16 = tpu.concatenate %12, %15 in 0 : vector<1x128xf32>, vector<1x128xf32> -> vector<2x128xf32>
    %c0_12 = arith.constant 0 : index
    %c0_13 = arith.constant 0 : index
    %c0_14 = arith.constant 0 : index
    %17 = vector.load %arg4[%c0_12, %c0_13, %c0_14] : memref<1x2x128xf32, #tpu.memory_space<vmem>>, vector<1x2x128xf32>
    %18 = vector.shape_cast %17 : vector<1x2x128xf32> to vector<2x128xf32>
    %19 = vector.shape_cast %16 : vector<2x128xf32> to vector<1x2x128xf32>
    tpu.vector_store %arg4[%c0_12, %c0_13, %c0_14], %19 {strides = array<i32>} : memref<1x2x128xf32, #tpu.memory_space<vmem>>, vector<1x2x128xf32>,
    return
  }
  func.func @transform_0(%arg0: i32) -> (i32, i32, i32, i32) {
    %c0_i32 = arith.constant 0 : i32
    %c0_i32_0 = arith.constant 0 : i32
    %c0_i32_1 = arith.constant 0 : i32
    %c0_i32_2 = arith.constant 0 : i32
    return %arg0, %c0_i32, %c0_i32_0, %c0_i32_1 : i32, i32, i32, i32
  }
  func.func @transform_1(%arg0: i32) -> (i32, i32, i32) {
    %c0_i32 = arith.constant 0 : i32
    %c0_i32_0 = arith.constant 0 : i32
    %c0_i32_1 = arith.constant 0 : i32
    %c0_i32_2 = arith.constant 0 : i32
    return %c0_i32, %c0_i32_0, %c0_i32_1 : i32, i32, i32
  }
  func.func @transform_2(%arg0: i32) -> (i32, i32, i32, i32) {
    %c0_i32 = arith.constant 0 : i32
    %c0_i32_0 = arith.constant 0 : i32
    %c0_i32_1 = arith.constant 0 : i32
    %c0_i32_2 = arith.constant 0 : i32
    return %arg0, %c0_i32, %c0_i32_0, %c0_i32_1 : i32, i32, i32, i32
  }
  func.func @transform_3(%arg0: i32) -> (i32, i32, i32) {
    %c0_i32 = arith.constant 0 : i32
    %c0_i32_0 = arith.constant 0 : i32
    %c0_i32_1 = arith.constant 0 : i32
    return %arg0, %c0_i32, %c0_i32_0 : i32, i32, i32
  }
}

module attributes {stable_mosaic.version = 11 : i64} {
  func.func @_bn_apply_kernel(%arg0: i32, %arg1: memref<512x128xbf16, #tpu.memory_space<vmem>>, %arg2: memref<1x128xf32, #tpu.memory_space<vmem>>, %arg3: memref<1x128xf32, #tpu.memory_space<vmem>>, %arg4: memref<512x128xbf16, #tpu.memory_space<vmem>>) attributes {dimension_semantics = [#tpu.dimension_semantics<parallel>], iteration_bounds = array<i64: 1>, scalar_prefetch = 0 : i64, scratch_operands = 0 : i64, tpu.core_type = #tpu.core_type<tc>, window_params = [{transform_indices = @transform_0, window_bounds = array<i64: 512, 128>}, {pipeline_mode = #tpu.pipeline_mode<synchronous>, transform_indices = @transform_1, window_bounds = array<i64: 1, 128>}, {pipeline_mode = #tpu.pipeline_mode<synchronous>, transform_indices = @transform_2, window_bounds = array<i64: 1, 128>}, {transform_indices = @transform_3, window_bounds = array<i64: 512, 128>}]} {
    %c0 = arith.constant 0 : index
    %c0_0 = arith.constant 0 : index
    %0 = vector.load %arg1[%c0, %c0_0] : memref<512x128xbf16, #tpu.memory_space<vmem>>, vector<512x128xbf16>
    %1 = arith.extf %0 : vector<512x128xbf16> to vector<512x128xf32>
    %c0_1 = arith.constant 0 : index
    %c0_2 = arith.constant 0 : index
    %2 = vector.load %arg2[%c0_1, %c0_2] : memref<1x128xf32, #tpu.memory_space<vmem>>, vector<1x128xf32>
    %3 = vector.broadcast %2 : vector<1x128xf32> to vector<512x128xf32>
    %4 = arith.mulf %1, %3 : vector<512x128xf32>
    %c0_3 = arith.constant 0 : index
    %c0_4 = arith.constant 0 : index
    %5 = vector.load %arg3[%c0_3, %c0_4] : memref<1x128xf32, #tpu.memory_space<vmem>>, vector<1x128xf32>
    %6 = vector.broadcast %5 : vector<1x128xf32> to vector<512x128xf32>
    %7 = arith.addf %4, %6 : vector<512x128xf32>
    %8 = arith.truncf %7 : vector<512x128xf32> to vector<512x128xbf16>
    %c0_5 = arith.constant 0 : index
    %c0_6 = arith.constant 0 : index
    %9 = vector.load %arg4[%c0_5, %c0_6] : memref<512x128xbf16, #tpu.memory_space<vmem>>, vector<512x128xbf16>
    tpu.vector_store %arg4[%c0_5, %c0_6], %8 {strides = array<i32>} : memref<512x128xbf16, #tpu.memory_space<vmem>>, vector<512x128xbf16>,
    return
  }
  func.func @transform_0(%arg0: i32) -> (i32, i32) {
    %c0_i32 = arith.constant 0 : i32
    %c0_i32_0 = arith.constant 0 : i32
    return %arg0, %c0_i32 : i32, i32
  }
  func.func @transform_1(%arg0: i32) -> (i32, i32) {
    %c0_i32 = arith.constant 0 : i32
    %c0_i32_0 = arith.constant 0 : i32
    %c0_i32_1 = arith.constant 0 : i32
    return %c0_i32, %c0_i32_0 : i32, i32
  }
  func.func @transform_2(%arg0: i32) -> (i32, i32) {
    %c0_i32 = arith.constant 0 : i32
    %c0_i32_0 = arith.constant 0 : i32
    %c0_i32_1 = arith.constant 0 : i32
    return %c0_i32, %c0_i32_0 : i32, i32
  }
  func.func @transform_3(%arg0: i32) -> (i32, i32) {
    %c0_i32 = arith.constant 0 : i32
    %c0_i32_0 = arith.constant 0 : i32
    return %arg0, %c0_i32 : i32, i32
  }
}

</mosaic_0001>

<llo_original>
// kernel: conv_block.3
$region0: #{conv_block.3}
  #allocation0 [shape = 'u32[]', space=smem, size = 0x4, offset = 0x4, fixed_abs, tag = 'smem constant byte address 0x4 - core index']
  #allocation1 [shape = 'u32[144,128]{1,0:T(1,128)}', space=vmem, size = 0x12000, scoped, tag = 'internal scratch']
  %s0 = inlined_call_operand.vmem [shape: bf16[512,128], index: 0, kind: input, shape index: {}, may-alias: {0,3}]
  %s1 = inlined_call_operand.vmem [shape: f32[1,128], index: 1, kind: input, shape index: {}]
  %s2 = inlined_call_operand.vmem [shape: f32[1,128], index: 2, kind: input, shape index: {}]
  %s3 = inlined_call_operand.vmem [shape: bf16[512,128], index: 3, kind: output, shape index: {}, may-alias: {0,3}]
  %s4 = sld [smem:[#allocation0]]
  $region22: #{conv_block.3} parent=0
    _
  %s6 = ssub.s32 1, %s4
  %s7 = scalar_select 0, %s6, %s4
  // Predicated region
  $region2: #{conv_block.3} parent=0 // pred_check
    _
  $region3: #{conv_block.3} parent=0 // pred_check_branch
    %9 = sbr.rel (0) target = $region5
  $region4: #{conv_block.3} parent=0 // pred_region
    _
  $region5: #{conv_block.3} parent=0 // pred_fallthru
    _
  // Predicated region
  $region6: #{conv_block.3} parent=0 // pred_check
    _
  $region7: #{conv_block.3} parent=0 // pred_check_branch
    %11 = sbr.rel (0) target = $region9
  $region8: #{conv_block.3} parent=0 // pred_region
    _
  $region9: #{conv_block.3} parent=0 // pred_fallthru
    _
  // Predicated region
  $region10: #{conv_block.3} parent=0 // pred_check
    _
  $region11: #{conv_block.3} parent=0 // pred_check_branch
    %13 = sbr.rel (0) target = $region13
  $region12: #{conv_block.3} parent=0 // pred_region
    _
  $region13: #{conv_block.3} parent=0 // pred_fallthru
    _
  %v14 = vld [vmem:[%s0] sm:$0xf]
  %v15 = vld [vmem:[%s0 + $0x4] sm:$0xf]
  %v16 = vld [vmem:[%s0 + $0x8] sm:$0xf]
  %v17 = vld [vmem:[%s0 + $0xc] sm:$0xf]
  %v18 = vld [vmem:[%s0 + $0x10] sm:$0xf]
  %v19 = vld [vmem:[%s0 + $0x14] sm:$0xf]
  %v20 = vld [vmem:[%s0 + $0x18] sm:$0xf]
  %v21 = vld [vmem:[%s0 + $0x1c] sm:$0xf]
  %v22 = vld [vmem:[%s0 + $0x20] sm:$0xf]
  %v23 = vld [vmem:[%s0 + $0x24] sm:$0xf]
  %v24 = vld [vmem:[%s0 + $0x28] sm:$0xf]
  %v25 = vld [vmem:[%s0 + $0x2c] sm:$0xf]
  %v26 = vld [vmem:[%s0 + $0x30] sm:$0xf]
  %v27 = vld [vmem:[%s0 + $0x34] sm:$0xf]
  %v28 = vld [vmem:[%s0 + $0x38] sm:$0xf]
  %v29 = vld [vmem:[%s0 + $0x3c] sm:$0xf]
  %v30 = vld [vmem:[%s0 + $0x40] sm:$0xf]
  %v31 = vld [vmem:[%s0 + $0x44] sm:$0xf]
  %v32 = vld [vmem:[%s0 + $0x48] sm:$0xf]
  %v33 = vld [vmem:[%s0 + $0x4c] sm:$0xf]
  %v34 = vld [vmem:[%s0 + $0x50] sm:$0xf]
  %v35 = vld [vmem:[%s0 + $0x54] sm:$0xf]
  %v36 = vld [vmem:[%s0 + $0x58] sm:$0xf]
  %v37 = vld [vmem:[%s0 + $0x5c] sm:$0xf]
  %v38 = vld [vmem:[%s0 + $0x60] sm:$0xf]
  %v39 = vld [vmem:[%s0 + $0x64] sm:$0xf]
  %v40 = vld [vmem:[%s0 + $0x68] sm:$0xf]
  %v41 = vld [vmem:[%s0 + $0x6c] sm:$0xf]
  %v42 = vld [vmem:[%s0 + $0x70] sm:$0xf]
  %v43 = vld [vmem:[%s0 + $0x74] sm:$0xf]
  %v44 = vld [vmem:[%s0 + $0x78] sm:$0xf]
  %v45 = vld [vmem:[%s0 + $0x7c] sm:$0xf]
  %v46 = vld [vmem:[%s0 + $0x80] sm:$0xf]
  %v47 = vld [vmem:[%s0 + $0x84] sm:$0xf]
  %v48 = vld [vmem:[%s0 + $0x88] sm:$0xf]
  %v49 = vld [vmem:[%s0 + $0x8c] sm:$0xf]
  %v50 = vld [vmem:[%s0 + $0x90] sm:$0xf]
  %v51 = vld [vmem:[%s0 + $0x94] sm:$0xf]
  %v52 = vld [vmem:[%s0 + $0x98] sm:$0xf]
  %v53 = vld [vmem:[%s0 + $0x9c] sm:$0xf]
  %v54 = vld [vmem:[%s0 + $0xa0] sm:$0xf]
  %v55 = vld [vmem:[%s0 + $0xa4] sm:$0xf]
  %v56 = vld [vmem:[%s0 + $0xa8] sm:$0xf]
  %v57 = vld [vmem:[%s0 + $0xac] sm:$0xf]
  %v58 = vld [vmem:[%s0 + $0xb0] sm:$0xf]
  %v59 = vld [vmem:[%s0 + $0xb4] sm:$0xf]
  %v60 = vld [vmem:[%s0 + $0xb8] sm:$0xf]
  %v61 = vld [vmem:[%s0 + $0xbc] sm:$0xf]
  %v62 = vld [vmem:[%s0 + $0xc0] sm:$0xf]
  %v63 = vld [vmem:[%s0 + $0xc4] sm:$0xf]
  %v64 = vld [vmem:[%s0 + $0xc8] sm:$0xf]
  %v65 = vld [vmem:[%s0 + $0xcc] sm:$0xf]
  %v66 = vld [vmem:[%s0 + $0xd0] sm:$0xf]
  %v67 = vld [vmem:[%s0 + $0xd4] sm:$0xf]
  %v68 = vld [vmem:[%s0 + $0xd8] sm:$0xf]
  %v69 = vld [vmem:[%s0 + $0xdc] sm:$0xf]
  %v70 = vld [vmem:[%s0 + $0xe0] sm:$0xf]
  %v71 = vld [vmem:[%s0 + $0xe4] sm:$0xf]
  %v72 = vld [vmem:[%s0 + $0xe8] sm:$0xf]
  %v73 = vld [vmem:[%s0 + $0xec] sm:$0xf]
  %v74 = vld [vmem:[%s0 + $0xf0] sm:$0xf]
  %v75 = vld [vmem:[%s0 + $0xf4] sm:$0xf]
  %v76 = vld [vmem:[%s0 + $0xf8] sm:$0xf]
  %v77 = vld [vmem:[%s0 + $0xfc] sm:$0xf]
  %v78 = vunpack.c.l.bf16 %v14
  %v79 = vunpack.c.l.bf16 %v15
  %v80 = vunpack.c.l.bf16 %v16
  %v81 = vunpack.c.l.bf16 %v17
  %v82 = vunpack.c.l.bf16 %v18
  %v83 = vunpack.c.l.bf16 %v19
  %v84 = vunpack.c.l.bf16 %v20
  %v85 = vunpack.c.l.bf16 %v21
  %v86 = vunpack.c.l.bf16 %v22
  %v87 = vunpack.c.l.bf16 %v23
  %v88 = vunpack.c.l.bf16 %v24
  %v89 = vunpack.c.l.bf16 %v25
  %v90 = vunpack.c.l.bf16 %v26
  %v91 = vunpack.c.l.bf16 %v27
  %v92 = vunpack.c.l.bf16 %v28
  %v93 = vunpack.c.l.bf16 %v29
  %v94 = vunpack.c.l.bf16 %v30
  %v95 = vunpack.c.l.bf16 %v31
  %v96 = vunpack.c.l.bf16 %v32
  %v97 = vunpack.c.l.bf16 %v33
  %v98 = vunpack.c.l.bf16 %v34
  %v99 = vunpack.c.l.bf16 %v35
  %v100 = vunpack.c.l.bf16 %v36
  %v101 = vunpack.c.l.bf16 %v37
  %v102 = vunpack.c.l.bf16 %v38
  %v103 = vunpack.c.l.bf16 %v39
  %v104 = vunpack.c.l.bf16 %v40
  %v105 = vunpack.c.l.bf16 %v41
  %v106 = vunpack.c.l.bf16 %v42
  %v107 = vunpack.c.l.bf16 %v43
  %v108 = vunpack.c.l.bf16 %v44
  %v109 = vunpack.c.l.bf16 %v45
  %v110 = vunpack.c.l.bf16 %v46
  %v111 = vunpack.c.l.bf16 %v47
  %v112 = vunpack.c.l.bf16 %v48
  %v113 = vunpack.c.l.bf16 %v49
  %v114 = vunpack.c.l.bf16 %v50
  %v115 = vunpack.c.l.bf16 %v51
  %v116 = vunpack.c.l.bf16 %v52
  %v117 = vunpack.c.l.bf16 %v53
  %v118 = vunpack.c.l.bf16 %v54
  %v119 = vunpack.c.l.bf16 %v55
  %v120 = vunpack.c.l.bf16 %v56
  %v121 = vunpack.c.l.bf16 %v57
  %v122 = vunpack.c.l.bf16 %v58
  %v123 = vunpack.c.l.bf16 %v59
  %v124 = vunpack.c.l.bf16 %v60
  %v125 = vunpack.c.l.bf16 %v61
  %v126 = vunpack.c.l.bf16 %v62
  %v127 = vunpack.c.l.bf16 %v63
  %v128 = vunpack.c.l.bf16 %v64
  %v129 = vunpack.c.l.bf16 %v65
  %v130 = vunpack.c.l.bf16 %v66
  %v131 = vunpack.c.l.bf16 %v67
  %v132 = vunpack.c.l.bf16 %v68
  %v133 = vunpack.c.l.bf16 %v69
  %v134 = vunpack.c.l.bf16 %v70
  %v135 = vunpack.c.l.bf16 %v71
  %v136 = vunpack.c.l.bf16 %v72
  %v137 = vunpack.c.l.bf16 %v73
  %v138 = vunpack.c.l.bf16 %v74
  %v139 = vunpack.c.l.bf16 %v75
  %v140 = vunpack.c.l.bf16 %v76
  %v141 = vunpack.c.l.bf16 %v77
  %v142 = vld [vmem:[%s1] sm:$0x1]
  %v144 = vlaneseq
  %v145 = vshrl.u32 %v144, 7
  %v146 = vsub.s32 0, %v145
  %v147 = vrot.slane %v142, %v146
  %v149 = vmul.f32 %v78, %v147
  %v150 = vmul.f32 %v79, %v147
  %v151 = vmul.f32 %v80, %v147
  %v152 = vmul.f32 %v81, %v147
  %v153 = vmul.f32 %v82, %v147
  %v154 = vmul.f32 %v83, %v147
  %v155 = vmul.f32 %v84, %v147
  %v156 = vmul.f32 %v85, %v147
  %v157 = vmul.f32 %v86, %v147
  %v158 = vmul.f32 %v87, %v147
  %v159 = vmul.f32 %v88, %v147
  %v160 = vmul.f32 %v89, %v147
  %v161 = vmul.f32 %v90, %v147
  %v162 = vmul.f32 %v91, %v147
  %v163 = vmul.f32 %v92, %v147
  %v164 = vmul.f32 %v93, %v147
  %v165 = vmul.f32 %v94, %v147
  %v166 = vmul.f32 %v95, %v147
  %v167 = vmul.f32 %v96, %v147
  %v168 = vmul.f32 %v97, %v147
  %v169 = vmul.f32 %v98, %v147
  %v170 = vmul.f32 %v99, %v147
  %v171 = vmul.f32 %v100, %v147
  %v172 = vmul.f32 %v101, %v147
  %v173 = vmul.f32 %v102, %v147
  %v174 = vmul.f32 %v103, %v147
  %v175 = vmul.f32 %v104, %v147
  %v176 = vmul.f32 %v105, %v147
  %v177 = vmul.f32 %v106, %v147
  %v178 = vmul.f32 %v107, %v147
  %v179 = vmul.f32 %v108, %v147
  %v180 = vmul.f32 %v109, %v147
  %v181 = vmul.f32 %v110, %v147
  %v182 = vmul.f32 %v111, %v147
  %v183 = vmul.f32 %v112, %v147
  %v184 = vmul.f32 %v113, %v147
  %v185 = vmul.f32 %v114, %v147
  %v186 = vmul.f32 %v115, %v147
  %v187 = vmul.f32 %v116, %v147
  %v188 = vmul.f32 %v117, %v147
  %v189 = vmul.f32 %v118, %v147
  %v190 = vmul.f32 %v119, %v147
  %v191 = vmul.f32 %v120, %v147
  %v192 = vmul.f32 %v121, %v147
  %v193 = vmul.f32 %v122, %v147
  %v194 = vmul.f32 %v123, %v147
  %v195 = vmul.f32 %v124, %v147
  %v196 = vmul.f32 %v125, %v147
  %v197 = vmul.f32 %v126, %v147
  %v198 = vmul.f32 %v127, %v147
  %v199 = vmul.f32 %v128, %v147
  %v200 = vmul.f32 %v129, %v147
  %v201 = vmul.f32 %v130, %v147
  %v202 = vmul.f32 %v131, %v147
  %v203 = vmul.f32 %v132, %v147
  %v204 = vmul.f32 %v133, %v147
  %v205 = vmul.f32 %v134, %v147
  %v206 = vmul.f32 %v135, %v147
  %v207 = vmul.f32 %v136, %v147
  %v208 = vmul.f32 %v137, %v147
  %v209 = vmul.f32 %v138, %v147
  %v210 = vmul.f32 %v139, %v147
  %v211 = vmul.f32 %v140, %v147
  %v212 = vmul.f32 %v141, %v147
  %v213 = vld [vmem:[%s2] sm:$0x1]
  %v215 = vlaneseq
  %v216 = vshrl.u32 %v215, 7
  %v217 = vsub.s32 0, %v216
  %v218 = vrot.slane %v213, %v217
  %v220 = vadd.f32 %v149, %v218
  %v221 = vadd.f32 %v150, %v218
  %v222 = vadd.f32 %v151, %v218
  %v223 = vadd.f32 %v152, %v218
  %v224 = vadd.f32 %v153, %v218
  %v225 = vadd.f32 %v154, %v218
  %v226 = vadd.f32 %v155, %v218
  %v227 = vadd.f32 %v156, %v218
  %v228 = vadd.f32 %v157, %v218
  %v229 = vadd.f32 %v158, %v218
  %v230 = vadd.f32 %v159, %v218
  %v231 = vadd.f32 %v160, %v218
  %v232 = vadd.f32 %v161, %v218
  %v233 = vadd.f32 %v162, %v218
  %v234 = vadd.f32 %v163, %v218
  %v235 = vadd.f32 %v164, %v218
  %v236 = vadd.f32 %v165, %v218
  %v237 = vadd.f32 %v166, %v218
  %v238 = vadd.f32 %v167, %v218
  %v239 = vadd.f32 %v168, %v218
  %v240 = vadd.f32 %v169, %v218
  %v241 = vadd.f32 %v170, %v218
  %v242 = vadd.f32 %v171, %v218
  %v243 = vadd.f32 %v172, %v218
  %v244 = vadd.f32 %v173, %v218
  %v245 = vadd.f32 %v174, %v218
  %v246 = vadd.f32 %v175, %v218
  %v247 = vadd.f32 %v176, %v218
  %v248 = vadd.f32 %v177, %v218
  %v249 = vadd.f32 %v178, %v218
  %v250 = vadd.f32 %v179, %v218
  %v251 = vadd.f32 %v180, %v218
  %v252 = vadd.f32 %v181, %v218
  %v253 = vadd.f32 %v182, %v218
  %v254 = vadd.f32 %v183, %v218
  %v255 = vadd.f32 %v184, %v218
  %v256 = vadd.f32 %v185, %v218
  %v257 = vadd.f32 %v186, %v218
  %v258 = vadd.f32 %v187, %v218
  %v259 = vadd.f32 %v188, %v218
  %v260 = vadd.f32 %v189, %v218
  %v261 = vadd.f32 %v190, %v218
  %v262 = vadd.f32 %v191, %v218
  %v263 = vadd.f32 %v192, %v218
  %v264 = vadd.f32 %v193, %v218
  %v265 = vadd.f32 %v194, %v218
  %v266 = vadd.f32 %v195, %v218
  %v267 = vadd.f32 %v196, %v218
  %v268 = vadd.f32 %v197, %v218
  %v269 = vadd.f32 %v198, %v218
  %v270 = vadd.f32 %v199, %v218
  %v271 = vadd.f32 %v200, %v218
  %v272 = vadd.f32 %v201, %v218
  %v273 = vadd.f32 %v202, %v218
  %v274 = vadd.f32 %v203, %v218
  %v275 = vadd.f32 %v204, %v218
  %v276 = vadd.f32 %v205, %v218
  %v277 = vadd.f32 %v206, %v218
  %v278 = vadd.f32 %v207, %v218
  %v279 = vadd.f32 %v208, %v218
  %v280 = vadd.f32 %v209, %v218
  %v281 = vadd.f32 %v210, %v218
  %v282 = vadd.f32 %v211, %v218
  %v283 = vadd.f32 %v212, %v218
  %v284 = vpack.c.bf16 %v221, %v220
  %v285 = vpack.c.bf16 %v223, %v222
  %v286 = vpack.c.bf16 %v225, %v224
  %v287 = vpack.c.bf16 %v227, %v226
  %v288 = vpack.c.bf16 %v229, %v228
  %v289 = vpack.c.bf16 %v231, %v230
  %v290 = vpack.c.bf16 %v233, %v232
  %v291 = vpack.c.bf16 %v235, %v234
  %v292 = vpack.c.bf16 %v237, %v236
  %v293 = vpack.c.bf16 %v239, %v238
  %v294 = vpack.c.bf16 %v241, %v240
  %v295 = vpack.c.bf16 %v243, %v242
  %v296 = vpack.c.bf16 %v245, %v244
  %v297 = vpack.c.bf16 %v247, %v246
  %v298 = vpack.c.bf16 %v249, %v248
  %v299 = vpack.c.bf16 %v251, %v250
  %v300 = vpack.c.bf16 %v253, %v252
  %v301 = vpack.c.bf16 %v255, %v254
  %v302 = vpack.c.bf16 %v257, %v256
  %v303 = vpack.c.bf16 %v259, %v258
  %v304 = vpack.c.bf16 %v261, %v260
  %v305 = vpack.c.bf16 %v263, %v262
  %v306 = vpack.c.bf16 %v265, %v264
  %v307 = vpack.c.bf16 %v267, %v266
  %v308 = vpack.c.bf16 %v269, %v268
  %v309 = vpack.c.bf16 %v271, %v270
  %v310 = vpack.c.bf16 %v273, %v272
  %v311 = vpack.c.bf16 %v275, %v274
  %v312 = vpack.c.bf16 %v277, %v276
  %v313 = vpack.c.bf16 %v279, %v278
  %v314 = vpack.c.bf16 %v281, %v280
  %v315 = vpack.c.bf16 %v283, %v282
  %v348 = vunpack.c.l.b16 %v284
  %v349 = vunpack.c.h.b16 %v284
  %v350 = vunpack.c.l.b16 %v285
  %v351 = vunpack.c.h.b16 %v285
  %v352 = vunpack.c.l.b16 %v286
  %v353 = vunpack.c.h.b16 %v286
  %v354 = vunpack.c.l.b16 %v287
  %v355 = vunpack.c.h.b16 %v287
  %v356 = vunpack.c.l.b16 %v288
  %v357 = vunpack.c.h.b16 %v288
  %v358 = vunpack.c.l.b16 %v289
  %v359 = vunpack.c.h.b16 %v289
  %v360 = vunpack.c.l.b16 %v290
  %v361 = vunpack.c.h.b16 %v290
  %v362 = vunpack.c.l.b16 %v291
  %v363 = vunpack.c.h.b16 %v291
  %v364 = vunpack.c.l.b16 %v292
  %v365 = vunpack.c.h.b16 %v292
  %v366 = vunpack.c.l.b16 %v293
  %v367 = vunpack.c.h.b16 %v293
  %v368 = vunpack.c.l.b16 %v294
  %v369 = vunpack.c.h.b16 %v294
  %v370 = vunpack.c.l.b16 %v295
  %v371 = vunpack.c.h.b16 %v295
  %v372 = vunpack.c.l.b16 %v296
  %v373 = vunpack.c.h.b16 %v296
  %v374 = vunpack.c.l.b16 %v297
  %v375 = vunpack.c.h.b16 %v297
  %v376 = vunpack.c.l.b16 %v298
  %v377 = vunpack.c.h.b16 %v298
  %v378 = vunpack.c.l.b16 %v299
  %v379 = vunpack.c.h.b16 %v299
  %v380 = vunpack.c.l.b16 %v300
  %v381 = vunpack.c.h.b16 %v300
  %v382 = vunpack.c.l.b16 %v301
  %v383 = vunpack.c.h.b16 %v301
  %v384 = vunpack.c.l.b16 %v302
  %v385 = vunpack.c.h.b16 %v302
  %v386 = vunpack.c.l.b16 %v303
  %v387 = vunpack.c.h.b16 %v303
  %v388 = vunpack.c.l.b16 %v304
  %v389 = vunpack.c.h.b16 %v304
  %v390 = vunpack.c.l.b16 %v305
  %v391 = vunpack.c.h.b16 %v305
  %v392 = vunpack.c.l.b16 %v306
  %v393 = vunpack.c.h.b16 %v306
  %v394 = vunpack.c.l.b16 %v307
  %v395 = vunpack.c.h.b16 %v307
  %v396 = vunpack.c.l.b16 %v308
  %v397 = vunpack.c.h.b16 %v308
  %v398 = vunpack.c.l.b16 %v309
  %v399 = vunpack.c.h.b16 %v309
  %v400 = vunpack.c.l.b16 %v310
  %v401 = vunpack.c.h.b16 %v310
  %v402 = vunpack.c.l.b16 %v311
  %v403 = vunpack.c.h.b16 %v311
  %v404 = vunpack.c.l.b16 %v312
  %v405 = vunpack.c.h.b16 %v312
  %v406 = vunpack.c.l.b16 %v313
  %v407 = vunpack.c.h.b16 %v313
  %v408 = vunpack.c.l.b16 %v314
  %v409 = vunpack.c.h.b16 %v314
  %v410 = vunpack.c.l.b16 %v315
  %v411 = vunpack.c.h.b16 %v315
  %v412 = vpack.c.b16 %v348, %v348
  %v413 = vpack.c.b16 %v349, %v349
  %v414 = vpack.c.b16 %v350, %v350
  %v415 = vpack.c.b16 %v351, %v351
  %v416 = vpack.c.b16 %v352, %v352
  %v417 = vpack.c.b16 %v353, %v353
  %v418 = vpack.c.b16 %v354, %v354
  %v419 = vpack.c.b16 %v355, %v355
  %v420 = vpack.c.b16 %v356, %v356
  %v421 = vpack.c.b16 %v357, %v357
  %v422 = vpack.c.b16 %v358, %v358
  %v423 = vpack.c.b16 %v359, %v359
  %v424 = vpack.c.b16 %v360, %v360
  %v425 = vpack.c.b16 %v361, %v361
  %v426 = vpack.c.b16 %v362, %v362
  %v427 = vpack.c.b16 %v363, %v363
  %v428 = vpack.c.b16 %v364, %v364
  %v429 = vpack.c.b16 %v365, %v365
  %v430 = vpack.c.b16 %v366, %v366
  %v431 = vpack.c.b16 %v367, %v367
  %v432 = vpack.c.b16 %v368, %v368
  %v433 = vpack.c.b16 %v369, %v369
  %v434 = vpack.c.b16 %v370, %v370
  %v435 = vpack.c.b16 %v371, %v371
  %v436 = vpack.c.b16 %v372, %v372
  %v437 = vpack.c.b16 %v373, %v373
  %v438 = vpack.c.b16 %v374, %v374
  %v439 = vpack.c.b16 %v375, %v375
  %v440 = vpack.c.b16 %v376, %v376
  %v441 = vpack.c.b16 %v377, %v377
  %v442 = vpack.c.b16 %v378, %v378
  %v443 = vpack.c.b16 %v379, %v379
  %v444 = vpack.c.b16 %v380, %v380
  %v445 = vpack.c.b16 %v381, %v381
  %v446 = vpack.c.b16 %v382, %v382
  %v447 = vpack.c.b16 %v383, %v383
  %v448 = vpack.c.b16 %v384, %v384
  %v449 = vpack.c.b16 %v385, %v385
  %v450 = vpack.c.b16 %v386, %v386
  %v451 = vpack.c.b16 %v387, %v387
  %v452 = vpack.c.b16 %v388, %v388
  %v453 = vpack.c.b16 %v389, %v389
  %v454 = vpack.c.b16 %v390, %v390
  %v455 = vpack.c.b16 %v391, %v391
  %v456 = vpack.c.b16 %v392, %v392
  %v457 = vpack.c.b16 %v393, %v393
  %v458 = vpack.c.b16 %v394, %v394
  %v459 = vpack.c.b16 %v395, %v395
  %v460 = vpack.c.b16 %v396, %v396
  %v461 = vpack.c.b16 %v397, %v397
  %v462 = vpack.c.b16 %v398, %v398
  %v463 = vpack.c.b16 %v399, %v399
  %v464 = vpack.c.b16 %v400, %v400
  %v465 = vpack.c.b16 %v401, %v401
  %v466 = vpack.c.b16 %v402, %v402
  %v467 = vpack.c.b16 %v403, %v403
  %v468 = vpack.c.b16 %v404, %v404
  %v469 = vpack.c.b16 %v405, %v405
  %v470 = vpack.c.b16 %v406, %v406
  %v471 = vpack.c.b16 %v407, %v407
  %v472 = vpack.c.b16 %v408, %v408
  %v473 = vpack.c.b16 %v409, %v409
  %v474 = vpack.c.b16 %v410, %v410
  %v475 = vpack.c.b16 %v411, %v411
  %540 = vst [vmem:[%s3] sm:$0xf] %v412
  %541 = vst [vmem:[%s3 + $0x4] sm:$0xf] %v413
  %542 = vst [vmem:[%s3 + $0x8] sm:$0xf] %v414
  %543 = vst [vmem:[%s3 + $0xc] sm:$0xf] %v415
  %544 = vst [vmem:[%s3 + $0x10] sm:$0xf] %v416
  %545 = vst [vmem:[%s3 + $0x14] sm:$0xf] %v417
  %546 = vst [vmem:[%s3 + $0x18] sm:$0xf] %v418
  %547 = vst [vmem:[%s3 + $0x1c] sm:$0xf] %v419
  %548 = vst [vmem:[%s3 + $0x20] sm:$0xf] %v420
  %549 = vst [vmem:[%s3 + $0x24] sm:$0xf] %v421
  %550 = vst [vmem:[%s3 + $0x28] sm:$0xf] %v422
  %551 = vst [vmem:[%s3 + $0x2c] sm:$0xf] %v423
  %552 = vst [vmem:[%s3 + $0x30] sm:$0xf] %v424
  %553 = vst [vmem:[%s3 + $0x34] sm:$0xf] %v425
  %554 = vst [vmem:[%s3 + $0x38] sm:$0xf] %v426
  %555 = vst [vmem:[%s3 + $0x3c] sm:$0xf] %v427
  %556 = vst [vmem:[%s3 + $0x40] sm:$0xf] %v428
  %557 = vst [vmem:[%s3 + $0x44] sm:$0xf] %v429
  %558 = vst [vmem:[%s3 + $0x48] sm:$0xf] %v430
  %559 = vst [vmem:[%s3 + $0x4c] sm:$0xf] %v431
  %560 = vst [vmem:[%s3 + $0x50] sm:$0xf] %v432
  %561 = vst [vmem:[%s3 + $0x54] sm:$0xf] %v433
  %562 = vst [vmem:[%s3 + $0x58] sm:$0xf] %v434
  %563 = vst [vmem:[%s3 + $0x5c] sm:$0xf] %v435
  %564 = vst [vmem:[%s3 + $0x60] sm:$0xf] %v436
  %565 = vst [vmem:[%s3 + $0x64] sm:$0xf] %v437
  %566 = vst [vmem:[%s3 + $0x68] sm:$0xf] %v438
  %567 = vst [vmem:[%s3 + $0x6c] sm:$0xf] %v439
  %568 = vst [vmem:[%s3 + $0x70] sm:$0xf] %v440
  %569 = vst [vmem:[%s3 + $0x74] sm:$0xf] %v441
  %570 = vst [vmem:[%s3 + $0x78] sm:$0xf] %v442
  %571 = vst [vmem:[%s3 + $0x7c] sm:$0xf] %v443
  %572 = vst [vmem:[%s3 + $0x80] sm:$0xf] %v444
  %573 = vst [vmem:[%s3 + $0x84] sm:$0xf] %v445
  %574 = vst [vmem:[%s3 + $0x88] sm:$0xf] %v446
  %575 = vst [vmem:[%s3 + $0x8c] sm:$0xf] %v447
  %576 = vst [vmem:[%s3 + $0x90] sm:$0xf] %v448
  %577 = vst [vmem:[%s3 + $0x94] sm:$0xf] %v449
  %578 = vst [vmem:[%s3 + $0x98] sm:$0xf] %v450
  %579 = vst [vmem:[%s3 + $0x9c] sm:$0xf] %v451
  %580 = vst [vmem:[%s3 + $0xa0] sm:$0xf] %v452
  %581 = vst [vmem:[%s3 + $0xa4] sm:$0xf] %v453
  %582 = vst [vmem:[%s3 + $0xa8] sm:$0xf] %v454
  %583 = vst [vmem:[%s3 + $0xac] sm:$0xf] %v455
  %584 = vst [vmem:[%s3 + $0xb0] sm:$0xf] %v456
  %585 = vst [vmem:[%s3 + $0xb4] sm:$0xf] %v457
  %586 = vst [vmem:[%s3 + $0xb8] sm:$0xf] %v458
  %587 = vst [vmem:[%s3 + $0xbc] sm:$0xf] %v459
  %588 = vst [vmem:[%s3 + $0xc0] sm:$0xf] %v460
  %589 = vst [vmem:[%s3 + $0xc4] sm:$0xf] %v461
  %590 = vst [vmem:[%s3 + $0xc8] sm:$0xf] %v462
  %591 = vst [vmem:[%s3 + $0xcc] sm:$0xf] %v463
  %592 = vst [vmem:[%s3 + $0xd0] sm:$0xf] %v464
  %593 = vst [vmem:[%s3 + $0xd4] sm:$0xf] %v465
  %594 = vst [vmem:[%s3 + $0xd8] sm:$0xf] %v466
  %595 = vst [vmem:[%s3 + $0xdc] sm:$0xf] %v467
  %596 = vst [vmem:[%s3 + $0xe0] sm:$0xf] %v468
  %597 = vst [vmem:[%s3 + $0xe4] sm:$0xf] %v469
  %598 = vst [vmem:[%s3 + $0xe8] sm:$0xf] %v470
  %599 = vst [vmem:[%s3 + $0xec] sm:$0xf] %v471
  %600 = vst [vmem:[%s3 + $0xf0] sm:$0xf] %v472
  %601 = vst [vmem:[%s3 + $0xf4] sm:$0xf] %v473
  %602 = vst [vmem:[%s3 + $0xf8] sm:$0xf] %v474
  %603 = vst [vmem:[%s3 + $0xfc] sm:$0xf] %v475
  // Predicated region
  $region14: #{conv_block.3} parent=0 // pred_check
    _
  $region15: #{conv_block.3} parent=0 // pred_check_branch
    %605 = sbr.rel (0) target = $region17
  $region16: #{conv_block.3} parent=0 // pred_region
    _
  $region17: #{conv_block.3} parent=0 // pred_fallthru
    _
  // Predicated region
  $region18: #{conv_block.3} parent=0 // pred_check
    _
  $region19: #{conv_block.3} parent=0 // pred_check_branch
    %607 = sbr.rel (0) target = $region21
  $region20: #{conv_block.3} parent=0 // pred_region
    _
  $region21: #{conv_block.3} parent=0 // pred_fallthru
    _

// kernel: conv_block.2
$region0: #{conv_block.2}
  #allocation0 [shape = 'u32[]', space=smem, size = 0x4, offset = 0x4, fixed_abs, tag = 'smem constant byte address 0x4 - core index']
  #allocation1 [shape = 'u32[144,128]{1,0:T(1,128)}', space=vmem, size = 0x12000, scoped, tag = 'internal scratch']
  %s0 = inlined_call_operand.vmem [shape: bf16[2,16,16,128], index: 0, kind: input, shape index: {}]
  %s1 = inlined_call_operand.vmem [shape: bf16[1,128,128], index: 1, kind: input, shape index: {}]
  %s2 = inlined_call_operand.vmem [shape: bf16[2,16,16,128], index: 2, kind: output, shape index: {0}]
  %s3 = inlined_call_operand.vmem [shape: f32[2,2,128], index: 3, kind: output, shape index: {1}]
  %4 = xla_tuple %s2, %s3
  %s5 = sld [smem:[#allocation0]]
  $region49: #{conv_block.2} parent=0
    _
  %s7 = ssub.s32 1, %s5
  %s8 = scalar_select 0, %s7, %s5
  loop: start=0, step=1, limit=4
  $region2: #{conv_block.2} parent=0 // loop_pre_header
    _
  $region3: #{conv_block.2} parent=0 // loop_header
    %s10 = sphi 0, %s14
    %p11 = scmp.ge.s32.totalorder %s10, 4
    %s20 = sphi 0, %s22
    %s23 = sphi 0, %s20
    %s24 = sphi 0, %s23
    %s40 = sphi 0, %s24
    %s44 = sphi 0, %s44
    %s46 = sphi 0, %s44
    %s47 = sphi 0, %s46
    %s61 = sphi 0, %s47
    %s67 = sphi 0, %s69
    %s70 = sphi 0, %s67
    %s71 = sphi 0, %s70
    %s87 = sphi 0, %s71
    %s93 = sphi 0, %s95
    %s96 = sphi 0, %s93
    %s97 = sphi 0, %s96
    %s113 = sphi 0, %s97
  $region4: #{conv_block.2} parent=0 // loop_header_branch
    %13 = sbr.rel (%p11) target = $region8
  $region5: #{conv_block.2} parent=0 // loop_body
    %s15 = ssub.s32 %s10, 1
    %s16 = ssub.s32 %s10, 2
    %s17 = sadd.s32 %s10, 1
    %s18 = ssub.s32 %s10, %s17
    %p19 = scmp.eq.s32.totalorder %s18, 0
    %s21 = sadd.s32 %s20, 1
    %s22 = scalar_select %p19, %s20, %s21
    %p25 = pneg %p19
    %p26 = scmp.eq.s32.totalorder %s10, 1
    %p27 = por %p25, %p26
    %p28 = scmp.ne.s32.totalorder %s20, %s23
    %p29 = scmp.eq.s32.totalorder %s10, 0
    %p30 = por %p28, %p29
    %p31 = scmp.ne.s32.totalorder %s20, %s23
    %p32 = scmp.eq.s32.totalorder %s15, 1
    %p33 = por %p31, %p32
    %p34 = scmp.ne.s32.totalorder %s23, %s24
    %p35 = scmp.eq.s32.totalorder %s15, 0
    %p36 = por %p34, %p35
    %p37 = scmp.ne.s32.totalorder %s23, %s24
    %p38 = scmp.eq.s32.totalorder %s16, 1
    %p39 = por %p37, %p38
    %p41 = scmp.ne.s32.totalorder %s24, %s40
    %p42 = scmp.eq.s32.totalorder %s16, 0
    %p43 = por %p41, %p42
    %s45 = sadd.s32 %s44, 1
    %p48 = scmp.eq.s32.totalorder %s10, 1
    %p49 = scmp.ne.s32.totalorder %s44, %s46
    %p50 = scmp.eq.s32.totalorder %s10, 0
    %p51 = por %p49, %p50
    %p52 = scmp.ne.s32.totalorder %s44, %s46
    %p53 = scmp.eq.s32.totalorder %s15, 1
    %p54 = por %p52, %p53
    %p55 = scmp.ne.s32.totalorder %s46, %s47
    %p56 = scmp.eq.s32.totalorder %s15, 0
    %p57 = por %p55, %p56
    %p58 = scmp.ne.s32.totalorder %s46, %s47
    %p59 = scmp.eq.s32.totalorder %s16, 1
    %p60 = por %p58, %p59
    %p62 = scmp.ne.s32.totalorder %s47, %s61
    %p63 = scmp.eq.s32.totalorder %s16, 0
    %p64 = por %p62, %p63
    %s65 = ssub.s32 %s10, %s17
    %p66 = scmp.eq.s32.totalorder %s65, 0
    %s68 = sadd.s32 %s67, 1
    %s69 = scalar_select %p66, %s67, %s68
    %p72 = pneg %p66
    %p73 = scmp.eq.s32.totalorder %s10, 1
    %p74 = por %p72, %p73
    %p75 = scmp.ne.s32.totalorder %s67, %s70
    %p76 = scmp.eq.s32.totalorder %s10, 0
    %p77 = por %p75, %p76
    %p78 = scmp.ne.s32.totalorder %s67, %s70
    %p79 = scmp.eq.s32.totalorder %s15, 1
    %p80 = por %p78, %p79
    %p81 = scmp.ne.s32.totalorder %s70, %s71
    %p82 = scmp.eq.s32.totalorder %s15, 0
    %p83 = por %p81, %p82
    %p84 = scmp.ne.s32.totalorder %s70, %s71
    %p85 = scmp.eq.s32.totalorder %s16, 1
    %p86 = por %p84, %p85
    %p88 = scmp.ne.s32.totalorder %s71, %s87
    %p89 = scmp.eq.s32.totalorder %s16, 0
    %p90 = por %p88, %p89
    %s91 = ssub.s32 %s10, %s17
    %p92 = scmp.eq.s32.totalorder %s91, 0
    %s94 = sadd.s32 %s93, 1
    %s95 = scalar_select %p92, %s93, %s94
    %p98 = pneg %p92
    %p99 = scmp.eq.s32.totalorder %s10, 1
    %p100 = por %p98, %p99
    %p101 = scmp.ne.s32.totalorder %s93, %s96
    %p102 = scmp.eq.s32.totalorder %s10, 0
    %p103 = por %p101, %p102
    %p104 = scmp.ne.s32.totalorder %s93, %s96
    %p105 = scmp.eq.s32.totalorder %s15, 1
    %p106 = por %p104, %p105
    %p107 = scmp.ne.s32.totalorder %s96, %s97
    %p108 = scmp.eq.s32.totalorder %s15, 0
    %p109 = por %p107, %p108
    %p110 = scmp.ne.s32.totalorder %s96, %s97
    %p111 = scmp.eq.s32.totalorder %s16, 1
    %p112 = por %p110, %p111
    %p114 = scmp.ne.s32.totalorder %s97, %s113
    %p115 = scmp.eq.s32.totalorder %s16, 0
    %p116 = por %p114, %p115
    %p117 = scmp.le.s32.totalorder 1, %s10
    %p118 = scmp.lt.s32.totalorder %s10, 3
    %p119 = pnand %p117, %p118
    %p120 = pneg %p119
    // Predicated region
    $region9: #{conv_block.2} parent=5 // pred_check
      _
    $region10: #{conv_block.2} parent=5 // pred_check_branch
      %122 = sbr.rel (%p119) target = $region12
    $region11: #{conv_block.2} parent=5 // pred_region
      %s123 = ssub.s32 %s10, 1
      // Predicated region
      $region13: #{conv_block.2} parent=11 // pred_check
        %p124 = pneg %p57
      $region14: #{conv_block.2} parent=11 // pred_check_branch
        %126 = sbr.rel (%p124) target = $region16
      $region15: #{conv_block.2} parent=11 // pred_region
        _
      $region16: #{conv_block.2} parent=11 // pred_fallthru
        _
    $region12: #{conv_block.2} parent=5 // pred_fallthru
      _
    %p127 = scmp.lt.s32.totalorder %s10, 2
    // Predicated region
    $region17: #{conv_block.2} parent=5 // pred_check
      %p128 = pneg %p127
    $region18: #{conv_block.2} parent=5 // pred_check_branch
      %130 = sbr.rel (%p128) target = $region20
    $region19: #{conv_block.2} parent=5 // pred_region
      // Predicated region
      $region21: #{conv_block.2} parent=19 // pred_check
        %p131 = pneg %p30
      $region22: #{conv_block.2} parent=19 // pred_check_branch
        %133 = sbr.rel (%p131) target = $region24
      $region23: #{conv_block.2} parent=19 // pred_region
        %p134 = scmp.lt.s32.totalorder %s10, 1
        %s135 = scalar_select %p134, %s10, 1
        %s136 = smul.addr %s135, 32
        %s137 = smul.addr %s136, 4
        %s138 = scalar_lea.vmem %s0, %s137
      $region24: #{conv_block.2} parent=19 // pred_fallthru
        _
    $region20: #{conv_block.2} parent=5 // pred_fallthru
      _
    %p139 = scmp.le.s32.totalorder 1, %s10
    %p140 = scmp.lt.s32.totalorder %s10, 3
    %p141 = pnand %p139, %p140
    %p142 = pneg %p141
    // Predicated region
    $region25: #{conv_block.2} parent=5 // pred_check
      _
    $region26: #{conv_block.2} parent=5 // pred_check_branch
      %144 = sbr.rel (%p141) target = $region28
    $region27: #{conv_block.2} parent=5 // pred_region
      %s145 = ssub.s32 %s10, 1
      %p146 = scmp.lt.s32.totalorder %s15, 1
      %s147 = scalar_select %p146, %s15, 1
      %s148 = smul.addr %s147, 32
      %s149 = smul.addr %s148, 4
      %s150 = scalar_lea.vmem %s0, %s149
      %p151 = pneg %p36
      %p152 = pneg %p33
      %p153 = pneg %p57
      %p154 = pneg %p54
      %p155 = pneg %p83
      %p156 = pneg %p80
      %p157 = scmp.lt.s32.totalorder %s15, 1
      %s158 = scalar_select %p157, %s15, 1
      %s159 = smul.addr %s158, 32
      %s160 = smul.addr %s159, 4
      %s161 = scalar_lea.vmem %s2, %s160
      %p162 = pneg %p109
      %p163 = pneg %p106
      %p164 = scmp.lt.s32.totalorder %s15, 1
      %s165 = scalar_select %p164, %s15, 1
      %s166 = smul.addr %s165, 2
      %s167 = scalar_lea.vmem %s3, %s166
      %p168 = scmp.lt.s32.totalorder %s15, 1
      %s169 = scalar_select %p168, %s15, 1
      %s170 = smul.addr %s169, 32
      %s171 = smul.addr %s170, 4
      %s172 = scalar_lea.vmem %s0, %s171
      %p173 = scmp.lt.s32.totalorder %s15, 1
      %s174 = scalar_select %p173, %s15, 1
      %s175 = smul.addr %s174, 32
      %s176 = smul.addr %s175, 4
      %s177 = scalar_lea.vmem %s2, %s176
      %p178 = scmp.lt.s32.totalorder %s15, 1
      %s179 = scalar_select %p178, %s15, 1
      %s180 = smul.addr %s179, 2
      %s181 = scalar_lea.vmem %s3, %s180
      %v183 = vld [vmem:[%s172] sm:$0xf]
      %v184 = vld [vmem:[%s172 + $0x4] sm:$0xf]
      %v185 = vld [vmem:[%s172 + $0x8] sm:$0xf]
      %v186 = vld [vmem:[%s172 + $0xc] sm:$0xf]
      %v187 = vld [vmem:[%s172 + $0x10] sm:$0xf]
      %v188 = vld [vmem:[%s172 + $0x14] sm:$0xf]
      %v189 = vld [vmem:[%s172 + $0x18] sm:$0xf]
      %v190 = vld [vmem:[%s172 + $0x1c] sm:$0xf]
      %v191 = vld [vmem:[%s172 + $0x20] sm:$0xf]
      %v192 = vld [vmem:[%s172 + $0x24] sm:$0xf]
      %v193 = vld [vmem:[%s172 + $0x28] sm:$0xf]
      %v194 = vld [vmem:[%s172 + $0x2c] sm:$0xf]
      %v195 = vld [vmem:[%s172 + $0x30] sm:$0xf]
      %v196 = vld [vmem:[%s172 + $0x34] sm:$0xf]
      %v197 = vld [vmem:[%s172 + $0x38] sm:$0xf]
      %v198 = vld [vmem:[%s172 + $0x3c] sm:$0xf]
      %v199 = vld [vmem:[%s172 + $0x40] sm:$0xf]
      %v200 = vld [vmem:[%s172 + $0x44] sm:$0xf]
      %v201 = vld [vmem:[%s172 + $0x48] sm:$0xf]
      %v202 = vld [vmem:[%s172 + $0x4c] sm:$0xf]
      %v203 = vld [vmem:[%s172 + $0x50] sm:$0xf]
      %v204 = vld [vmem:[%s172 + $0x54] sm:$0xf]
      %v205 = vld [vmem:[%s172 + $0x58] sm:$0xf]
      %v206 = vld [vmem:[%s172 + $0x5c] sm:$0xf]
      %v207 = vld [vmem:[%s172 + $0x60] sm:$0xf]
      %v208 = vld [vmem:[%s172 + $0x64] sm:$0xf]
      %v209 = vld [vmem:[%s172 + $0x68] sm:$0xf]
      %v210 = vld [vmem:[%s172 + $0x6c] sm:$0xf]
      %v211 = vld [vmem:[%s172 + $0x70] sm:$0xf]
      %v212 = vld [vmem:[%s172 + $0x74] sm:$0xf]
      %v213 = vld [vmem:[%s172 + $0x78] sm:$0xf]
      %v214 = vld [vmem:[%s172 + $0x7c] sm:$0xf]
      %v215 = vld [vmem:[%s1] sm:$0xf]
      %v216 = vld [vmem:[%s1 + $0x4] sm:$0xf]
      %v217 = vld [vmem:[%s1 + $0x8] sm:$0xf]
      %v218 = vld [vmem:[%s1 + $0xc] sm:$0xf]
      %v219 = vld [vmem:[%s1 + $0x10] sm:$0xf]
      %v220 = vld [vmem:[%s1 + $0x14] sm:$0xf]
      %v221 = vld [vmem:[%s1 + $0x18] sm:$0xf]
      %v222 = vld [vmem:[%s1 + $0x1c] sm:$0xf]
      %v223 = vld [vmem:[%s1 + $0x20] sm:$0xf]
      %v224 = vld [vmem:[%s1 + $0x24] sm:$0xf]
      %v225 = vld [vmem:[%s1 + $0x28] sm:$0xf]
      %v226 = vld [vmem:[%s1 + $0x2c] sm:$0xf]
      %v227 = vld [vmem:[%s1 + $0x30] sm:$0xf]
      %v228 = vld [vmem:[%s1 + $0x34] sm:$0xf]
      %v229 = vld [vmem:[%s1 + $0x38] sm:$0xf]
      %v230 = vld [vmem:[%s1 + $0x3c] sm:$0xf]
      %v263 = vunpack.c.l.b16 %v183
      %v264 = vunpack.c.l.b16 %v184
      %v265 = vunpack.c.l.b16 %v185
      %v266 = vunpack.c.l.b16 %v186
      %v267 = vunpack.c.l.b16 %v187
      %v268 = vunpack.c.l.b16 %v188
      %v269 = vunpack.c.l.b16 %v189
      %v270 = vunpack.c.l.b16 %v190
      %v271 = vunpack.c.l.b16 %v191
      %v272 = vunpack.c.l.b16 %v192
      %v273 = vunpack.c.l.b16 %v193
      %v274 = vunpack.c.l.b16 %v194
      %v275 = vunpack.c.l.b16 %v195
      %v276 = vunpack.c.l.b16 %v196
      %v277 = vunpack.c.l.b16 %v197
      %v278 = vunpack.c.l.b16 %v198
      %v279 = vunpack.c.l.b16 %v199
      %v280 = vunpack.c.l.b16 %v200
      %v281 = vunpack.c.l.b16 %v201
      %v282 = vunpack.c.l.b16 %v202
      %v283 = vunpack.c.l.b16 %v203
      %v284 = vunpack.c.l.b16 %v204
      %v285 = vunpack.c.l.b16 %v205
      %v286 = vunpack.c.l.b16 %v206
      %v287 = vunpack.c.l.b16 %v207
      %v288 = vunpack.c.l.b16 %v208
      %v289 = vunpack.c.l.b16 %v209
      %v290 = vunpack.c.l.b16 %v210
      %v291 = vunpack.c.l.b16 %v211
      %v292 = vunpack.c.l.b16 %v212
      %v293 = vunpack.c.l.b16 %v213
      %v294 = vunpack.c.l.b16 %v214
      %v295 = vpack.c.b16 %v264, %v263
      %v296 = vpack.c.b16 %v266, %v265
      %v297 = vpack.c.b16 %v268, %v267
      %v298 = vpack.c.b16 %v270, %v269
      %v299 = vpack.c.b16 %v272, %v271
      %v300 = vpack.c.b16 %v274, %v273
      %v301 = vpack.c.b16 %v276, %v275
      %v302 = vpack.c.b16 %v278, %v277
      %v303 = vpack.c.b16 %v280, %v279
      %v304 = vpack.c.b16 %v282, %v281
      %v305 = vpack.c.b16 %v284, %v283
      %v306 = vpack.c.b16 %v286, %v285
      %v307 = vpack.c.b16 %v288, %v287
      %v308 = vpack.c.b16 %v290, %v289
      %v309 = vpack.c.b16 %v292, %v291
      %v310 = vpack.c.b16 %v294, %v293
      %v343 = vunpack.c.l.b16 %v215
      %v344 = vunpack.c.l.b16 %v216
      %v345 = vunpack.c.l.b16 %v217
      %v346 = vunpack.c.l.b16 %v218
      %v347 = vunpack.c.l.b16 %v219
      %v348 = vunpack.c.l.b16 %v220
      %v349 = vunpack.c.l.b16 %v221
      %v350 = vunpack.c.l.b16 %v222
      %v351 = vunpack.c.l.b16 %v223
      %v352 = vunpack.c.l.b16 %v224
      %v353 = vunpack.c.l.b16 %v225
      %v354 = vunpack.c.l.b16 %v226
      %v355 = vunpack.c.l.b16 %v227
      %v356 = vunpack.c.l.b16 %v228
      %v357 = vunpack.c.l.b16 %v229
      %v358 = vunpack.c.l.b16 %v230
      %v359 = vpack.c.b16 %v344, %v343
      %v360 = vpack.c.b16 %v346, %v345
      %v361 = vpack.c.b16 %v348, %v347
      %v362 = vpack.c.b16 %v350, %v349
      %v363 = vpack.c.b16 %v352, %v351
      %v364 = vpack.c.b16 %v354, %v353
      %v365 = vpack.c.b16 %v356, %v355
      %v366 = vpack.c.b16 %v358, %v357
      %375 = vmatprep.subr.bf16.mxu0 0
      %376 = vmatpush1.bf16.msra.mxu0 %v359
      %377 = vmatprep.subr.bf16.mxu0 0
      %378 = vmatpush1.bf16.msra.mxu0 %v360
      %379 = vmatprep.subr.bf16.mxu0 0
      %380 = vmatpush1.bf16.msra.mxu0 %v361
      %381 = vmatprep.subr.bf16.mxu0 0
      %382 = vmatpush1.bf16.msra.mxu0 %v362
      %383 = vmatprep.subr.bf16.mxu0 0
      %384 = vmatpush1.bf16.msra.mxu0 %v363
      %385 = vmatprep.subr.bf16.mxu0 0
      %386 = vmatpush1.bf16.msra.mxu0 %v364
      %387 = vmatprep.subr.bf16.mxu0 0
      %388 = vmatpush1.bf16.msra.mxu0 %v365
      %389 = vmatprep.subr.bf16.mxu0 0
      %390 = vmatpush1.bf16.msra.mxu0 %v366
      %391 = vmatprep.subr.bf16.mxu0 0
      %392 = vmatpush1.bf16.msra.mxu0 0
      %393 = vmatprep.subr.bf16.mxu0 0
      %394 = vmatpush1.bf16.msra.mxu0 0
      %395 = vmatprep.subr.bf16.mxu0 0
      %396 = vmatpush1.bf16.msra.mxu0 0
      %397 = vmatprep.subr.bf16.mxu0 0
      %398 = vmatpush1.bf16.msra.mxu0 0
      %399 = vmatprep.subr.bf16.mxu0 0
      %400 = vmatpush1.bf16.msra.mxu0 0
      %401 = vmatprep.subr.bf16.mxu0 0
      %402 = vmatpush1.bf16.msra.mxu0 0
      %403 = vmatprep.subr.bf16.mxu0 0
      %404 = vmatpush1.bf16.msra.mxu0 0
      %405 = vmatprep.subr.bf16.mxu0 0
      %406 = vmatpush1.bf16.msra.mxu0 0
      %407 = vmatprep.mubr.bf16.mxu0 0
      %408 = vmatmul.mubr.bf16.gmra.mrb[0].mxu0 %v295
      %v409 = vpop.f32.mrb[0].mxu0
      %v410 = vadd.f32 0.0, %v409
      %v411 = vpop.f32.mrb[0].mxu0
      %v412 = vpop.f32.mrb[0].mxu0
      %v413 = vadd.f32 0.0, %v412
      %v414 = vpop.f32.mrb[0].mxu0
      %415 = vmatprep.mubr.bf16.mxu0 0
      %416 = vmatmul.mubr.bf16.gmra.mrb[0].mxu0 %v296
      %v417 = vpop.f32.mrb[0].mxu0
      %v418 = vadd.f32 0.0, %v417
      %v419 = vpop.f32.mrb[0].mxu0
      %v420 = vpop.f32.mrb[0].mxu0
      %v421 = vadd.f32 0.0, %v420
      %v422 = vpop.f32.mrb[0].mxu0
      %423 = vmatprep.mubr.bf16.mxu0 0
      %424 = vmatmul.mubr.bf16.gmra.mrb[0].mxu0 %v297
      %v425 = vpop.f32.mrb[0].mxu0
      %v426 = vadd.f32 0.0, %v425
      %v427 = vpop.f32.mrb[0].mxu0
      %v428 = vpop.f32.mrb[0].mxu0
      %v429 = vadd.f32 0.0, %v428
      %v430 = vpop.f32.mrb[0].mxu0
      %431 = vmatprep.mubr.bf16.mxu0 0
      %432 = vmatmul.mubr.bf16.gmra.mrb[0].mxu0 %v298
      %v433 = vpop.f32.mrb[0].mxu0
      %v434 = vadd.f32 0.0, %v433
      %v435 = vpop.f32.mrb[0].mxu0
      %v436 = vpop.f32.mrb[0].mxu0
      %v437 = vadd.f32 0.0, %v436
      %v438 = vpop.f32.mrb[0].mxu0
      %439 = vmatprep.mubr.bf16.mxu0 0
      %440 = vmatmul.mubr.bf16.gmra.mrb[0].mxu0 %v299
      %v441 = vpop.f32.mrb[0].mxu0
      %v442 = vadd.f32 0.0, %v441
      %v443 = vpop.f32.mrb[0].mxu0
      %v444 = vpop.f32.mrb[0].mxu0
      %v445 = vadd.f32 0.0, %v444
      %v446 = vpop.f32.mrb[0].mxu0
      %447 = vmatprep.mubr.bf16.mxu0 0
      %448 = vmatmul.mubr.bf16.gmra.mrb[0].mxu0 %v300
      %v449 = vpop.f32.mrb[0].mxu0
      %v450 = vadd.f32 0.0, %v449
      %v451 = vpop.f32.mrb[0].mxu0
      %v452 = vpop.f32.mrb[0].mxu0
      %v453 = vadd.f32 0.0, %v452
      %v454 = vpop.f32.mrb[0].mxu0
      %455 = vmatprep.mubr.bf16.mxu0 0
      %456 = vmatmul.mubr.bf16.gmra.mrb[0].mxu0 %v301
      %v457 = vpop.f32.mrb[0].mxu0
      %v458 = vadd.f32 0.0, %v457
      %v459 = vpop.f32.mrb[0].mxu0
      %v460 = vpop.f32.mrb[0].mxu0
      %v461 = vadd.f32 0.0, %v460
      %v462 = vpop.f32.mrb[0].mxu0
      %463 = vmatprep.mubr.bf16.mxu0 0
      %464 = vmatmul.mubr.bf16.gmra.mrb[0].mxu0 %v302
      %v465 = vpop.f32.mrb[0].mxu0
      %v466 = vadd.f32 0.0, %v465
      %v467 = vpop.f32.mrb[0].mxu0
      %v468 = vpop.f32.mrb[0].mxu0
      %v469 = vadd.f32 0.0, %v468
      %v470 = vpop.f32.mrb[0].mxu0
      %471 = vmatprep.mubr.bf16.mxu0 0
      %472 = vmatmul.mubr.bf16.gmra.mrb[0].mxu0 %v303
      %v473 = vpop.f32.mrb[0].mxu0
      %v474 = vadd.f32 0.0, %v473
      %v475 = vpop.f32.mrb[0].mxu0
      %v476 = vpop.f32.mrb[0].mxu0
      %v477 = vadd.f32 0.0, %v476
      %v478 = vpop.f32.mrb[0].mxu0
      %479 = vmatprep.mubr.bf16.mxu0 0
      %480 = vmatmul.mubr.bf16.gmra.mrb[0].mxu0 %v304
      %v481 = vpop.f32.mrb[0].mxu0
      %v482 = vadd.f32 0.0, %v481
      %v483 = vpop.f32.mrb[0].mxu0
      %v484 = vpop.f32.mrb[0].mxu0
      %v485 = vadd.f32 0.0, %v484
      %v486 = vpop.f32.mrb[0].mxu0
      %487 = vmatprep.mubr.bf16.mxu0 0
      %488 = vmatmul.mubr.bf16.gmra.mrb[0].mxu0 %v305
      %v489 = vpop.f32.mrb[0].mxu0
      %v490 = vadd.f32 0.0, %v489
      %v491 = vpop.f32.mrb[0].mxu0
      %v492 = vpop.f32.mrb[0].mxu0
      %v493 = vadd.f32 0.0, %v492
      %v494 = vpop.f32.mrb[0].mxu0
      %495 = vmatprep.mubr.bf16.mxu0 0
      %496 = vmatmul.mubr.bf16.gmra.mrb[0].mxu0 %v306
      %v497 = vpop.f32.mrb[0].mxu0
      %v498 = vadd.f32 0.0, %v497
      %v499 = vpop.f32.mrb[0].mxu0
      %v500 = vpop.f32.mrb[0].mxu0
      %v501 = vadd.f32 0.0, %v500
      %v502 = vpop.f32.mrb[0].mxu0
      %503 = vmatprep.mubr.bf16.mxu0 0
      %504 = vmatmul.mubr.bf16.gmra.mrb[0].mxu0 %v307
      %v505 = vpop.f32.mrb[0].mxu0
      %v506 = vadd.f32 0.0, %v505
      %v507 = vpop.f32.mrb[0].mxu0
      %v508 = vpop.f32.mrb[0].mxu0
      %v509 = vadd.f32 0.0, %v508
      %v510 = vpop.f32.mrb[0].mxu0
      %511 = vmatprep.mubr.bf16.mxu0 0
      %512 = vmatmul.mubr.bf16.gmra.mrb[0].mxu0 %v308
      %v513 = vpop.f32.mrb[0].mxu0
      %v514 = vadd.f32 0.0, %v513
      %v515 = vpop.f32.mrb[0].mxu0
      %v516 = vpop.f32.mrb[0].mxu0
      %v517 = vadd.f32 0.0, %v516
      %v518 = vpop.f32.mrb[0].mxu0
      %519 = vmatprep.mubr.bf16.mxu0 0
      %520 = vmatmul.mubr.bf16.gmra.mrb[0].mxu0 %v309
      %v521 = vpop.f32.mrb[0].mxu0
      %v522 = vadd.f32 0.0, %v521
      %v523 = vpop.f32.mrb[0].mxu0
      %v524 = vpop.f32.mrb[0].mxu0
      %v525 = vadd.f32 0.0, %v524
      %v526 = vpop.f32.mrb[0].mxu0
      %527 = vmatprep.mubr.bf16.mxu0 0
      %528 = vmatmul.mubr.bf16.gmra.mrb[0].mxu0 %v310
      %v529 = vpop.f32.mrb[0].mxu0
      %v530 = vadd.f32 0.0, %v529
      %v531 = vpop.f32.mrb[0].mxu0
      %v532 = vpop.f32.mrb[0].mxu0
      %v533 = vadd.f32 0.0, %v532
      %v534 = vpop.f32.mrb[0].mxu0
      %535 = vdwg.mxu0
      %v536 = vpack.c.bf16 %v413, %v410
      %v537 = vpack.c.bf16 %v421, %v418
      %v538 = vpack.c.bf16 %v429, %v426
      %v539 = vpack.c.bf16 %v437, %v434
      %v540 = vpack.c.bf16 %v445, %v442
      %v541 = vpack.c.bf16 %v453, %v450
      %v542 = vpack.c.bf16 %v461, %v458
      %v543 = vpack.c.bf16 %v469, %v466
      %v544 = vpack.c.bf16 %v477, %v474
      %v545 = vpack.c.bf16 %v485, %v482
      %v546 = vpack.c.bf16 %v493, %v490
      %v547 = vpack.c.bf16 %v501, %v498
      %v548 = vpack.c.bf16 %v509, %v506
      %v549 = vpack.c.bf16 %v517, %v514
      %v550 = vpack.c.bf16 %v525, %v522
      %v551 = vpack.c.bf16 %v533, %v530
      %v568 = vunpack.c.l.b16 %v536
      %v569 = vunpack.c.h.b16 %v536
      %v570 = vunpack.c.l.b16 %v537
      %v571 = vunpack.c.h.b16 %v537
      %v572 = vunpack.c.l.b16 %v538
      %v573 = vunpack.c.h.b16 %v538
      %v574 = vunpack.c.l.b16 %v539
      %v575 = vunpack.c.h.b16 %v539
      %v576 = vunpack.c.l.b16 %v540
      %v577 = vunpack.c.h.b16 %v540
      %v578 = vunpack.c.l.b16 %v541
      %v579 = vunpack.c.h.b16 %v541
      %v580 = vunpack.c.l.b16 %v542
      %v581 = vunpack.c.h.b16 %v542
      %v582 = vunpack.c.l.b16 %v543
      %v583 = vunpack.c.h.b16 %v543
      %v584 = vunpack.c.l.b16 %v544
      %v585 = vunpack.c.h.b16 %v544
      %v586 = vunpack.c.l.b16 %v545
      %v587 = vunpack.c.h.b16 %v545
      %v588 = vunpack.c.l.b16 %v546
      %v589 = vunpack.c.h.b16 %v546
      %v590 = vunpack.c.l.b16 %v547
      %v591 = vunpack.c.h.b16 %v547
      %v592 = vunpack.c.l.b16 %v548
      %v593 = vunpack.c.h.b16 %v548
      %v594 = vunpack.c.l.b16 %v549
      %v595 = vunpack.c.h.b16 %v549
      %v596 = vunpack.c.l.b16 %v550
      %v597 = vunpack.c.h.b16 %v550
      %v598 = vunpack.c.l.b16 %v551
      %v599 = vunpack.c.h.b16 %v551
      %v600 = vpack.c.b16 %v568, %v568
      %v601 = vpack.c.b16 %v569, %v569
      %v602 = vpack.c.b16 %v570, %v570
      %v603 = vpack.c.b16 %v571, %v571
      %v604 = vpack.c.b16 %v572, %v572
      %v605 = vpack.c.b16 %v573, %v573
      %v606 = vpack.c.b16 %v574, %v574
      %v607 = vpack.c.b16 %v575, %v575
      %v608 = vpack.c.b16 %v576, %v576
      %v609 = vpack.c.b16 %v577, %v577
      %v610 = vpack.c.b16 %v578, %v578
      %v611 = vpack.c.b16 %v579, %v579
      %v612 = vpack.c.b16 %v580, %v580
      %v613 = vpack.c.b16 %v581, %v581
      %v614 = vpack.c.b16 %v582, %v582
      %v615 = vpack.c.b16 %v583, %v583
      %v616 = vpack.c.b16 %v584, %v584
      %v617 = vpack.c.b16 %v585, %v585
      %v618 = vpack.c.b16 %v586, %v586
      %v619 = vpack.c.b16 %v587, %v587
      %v620 = vpack.c.b16 %v588, %v588
      %v621 = vpack.c.b16 %v589, %v589
      %v622 = vpack.c.b16 %v590, %v590
      %v623 = vpack.c.b16 %v591, %v591
      %v624 = vpack.c.b16 %v592, %v592
      %v625 = vpack.c.b16 %v593, %v593
      %v626 = vpack.c.b16 %v594, %v594
      %v627 = vpack.c.b16 %v595, %v595
      %v628 = vpack.c.b16 %v596, %v596
      %v629 = vpack.c.b16 %v597, %v597
      %v630 = vpack.c.b16 %v598, %v598
      %v631 = vpack.c.b16 %v599, %v599
      %664 = vst [vmem:[%s177] sm:$0xf] %v600
      %665 = vst [vmem:[%s177 + $0x4] sm:$0xf] %v601
      %666 = vst [vmem:[%s177 + $0x8] sm:$0xf] %v602
      %667 = vst [vmem:[%s177 + $0xc] sm:$0xf] %v603
      %668 = vst [vmem:[%s177 + $0x10] sm:$0xf] %v604
      %669 = vst [vmem:[%s177 + $0x14] sm:$0xf] %v605
      %670 = vst [vmem:[%s177 + $0x18] sm:$0xf] %v606
      %671 = vst [vmem:[%s177 + $0x1c] sm:$0xf] %v607
      %672 = vst [vmem:[%s177 + $0x20] sm:$0xf] %v608
      %673 = vst [vmem:[%s177 + $0x24] sm:$0xf] %v609
      %674 = vst [vmem:[%s177 + $0x28] sm:$0xf] %v610
      %675 = vst [vmem:[%s177 + $0x2c] sm:$0xf] %v611
      %676 = vst [vmem:[%s177 + $0x30] sm:$0xf] %v612
      %677 = vst [vmem:[%s177 + $0x34] sm:$0xf] %v613
      %678 = vst [vmem:[%s177 + $0x38] sm:$0xf] %v614
      %679 = vst [vmem:[%s177 + $0x3c] sm:$0xf] %v615
      %680 = vst [vmem:[%s177 + $0x40] sm:$0xf] %v616
      %681 = vst [vmem:[%s177 + $0x44] sm:$0xf] %v617
      %682 = vst [vmem:[%s177 + $0x48] sm:$0xf] %v618
      %683 = vst [vmem:[%s177 + $0x4c] sm:$0xf] %v619
      %684 = vst [vmem:[%s177 + $0x50] sm:$0xf] %v620
      %685 = vst [vmem:[%s177 + $0x54] sm:$0xf] %v621
      %686 = vst [vmem:[%s177 + $0x58] sm:$0xf] %v622
      %687 = vst [vmem:[%s177 + $0x5c] sm:$0xf] %v623
      %688 = vst [vmem:[%s177 + $0x60] sm:$0xf] %v624
      %689 = vst [vmem:[%s177 + $0x64] sm:$0xf] %v625
      %690 = vst [vmem:[%s177 + $0x68] sm:$0xf] %v626
      %691 = vst [vmem:[%s177 + $0x6c] sm:$0xf] %v627
      %692 = vst [vmem:[%s177 + $0x70] sm:$0xf] %v628
      %693 = vst [vmem:[%s177 + $0x74] sm:$0xf] %v629
      %694 = vst [vmem:[%s177 + $0x78] sm:$0xf] %v630
      %695 = vst [vmem:[%s177 + $0x7c] sm:$0xf] %v631
      %v696 = vadd.f32 %v410, %v413
      %v697 = vadd.f32 %v696, %v418
      %v698 = vadd.f32 %v697, %v421
      %v699 = vadd.f32 %v698, %v426
      %v700 = vadd.f32 %v699, %v429
      %v701 = vadd.f32 %v700, %v434
      %v702 = vadd.f32 %v701, %v437
      %v703 = vadd.f32 %v702, %v442
      %v704 = vadd.f32 %v703, %v445
      %v705 = vadd.f32 %v704, %v450
      %v706 = vadd.f32 %v705, %v453
      %v707 = vadd.f32 %v706, %v458
      %v708 = vadd.f32 %v707, %v461
      %v709 = vadd.f32 %v708, %v466
      %v710 = vadd.f32 %v709, %v469
      %v711 = vadd.f32 %v710, %v474
      %v712 = vadd.f32 %v711, %v477
      %v713 = vadd.f32 %v712, %v482
      %v714 = vadd.f32 %v713, %v485
      %v715 = vadd.f32 %v714, %v490
      %v716 = vadd.f32 %v715, %v493
      %v717 = vadd.f32 %v716, %v498
      %v718 = vadd.f32 %v717, %v501
      %v719 = vadd.f32 %v718, %v506
      %v720 = vadd.f32 %v719, %v509
      %v721 = vadd.f32 %v720, %v514
      %v722 = vadd.f32 %v721, %v517
      %v723 = vadd.f32 %v722, %v522
      %v724 = vadd.f32 %v723, %v525
      %v725 = vadd.f32 %v724, %v530
      %v726 = vadd.f32 %v725, %v533
      %v727 = vrot.slane %v726, 4
      %v728 = vadd.f32 %v726, %v727
      %v729 = vrot.slane %v728, 2
      %v730 = vadd.f32 %v728, %v729
      %v731 = vrot.slane %v730, 1
      %v732 = vadd.f32 %v730, %v731
      %v733 = vmul.f32 %v410, %v410
      %v734 = vmul.f32 %v413, %v413
      %v735 = vmul.f32 %v418, %v418
      %v736 = vmul.f32 %v421, %v421
      %v737 = vmul.f32 %v426, %v426
      %v738 = vmul.f32 %v429, %v429
      %v739 = vmul.f32 %v434, %v434
      %v740 = vmul.f32 %v437, %v437
      %v741 = vmul.f32 %v442, %v442
      %v742 = vmul.f32 %v445, %v445
      %v743 = vmul.f32 %v450, %v450
      %v744 = vmul.f32 %v453, %v453
      %v745 = vmul.f32 %v458, %v458
      %v746 = vmul.f32 %v461, %v461
      %v747 = vmul.f32 %v466, %v466
      %v748 = vmul.f32 %v469, %v469
      %v749 = vmul.f32 %v474, %v474
      %v750 = vmul.f32 %v477, %v477
      %v751 = vmul.f32 %v482, %v482
      %v752 = vmul.f32 %v485, %v485
      %v753 = vmul.f32 %v490, %v490
      %v754 = vmul.f32 %v493, %v493
      %v755 = vmul.f32 %v498, %v498
      %v756 = vmul.f32 %v501, %v501
      %v757 = vmul.f32 %v506, %v506
      %v758 = vmul.f32 %v509, %v509
      %v759 = vmul.f32 %v514, %v514
      %v760 = vmul.f32 %v517, %v517
      %v761 = vmul.f32 %v522, %v522
      %v762 = vmul.f32 %v525, %v525
      %v763 = vmul.f32 %v530, %v530
      %v764 = vmul.f32 %v533, %v533
      %v765 = vadd.f32 %v733, %v734
      %v766 = vadd.f32 %v765, %v735
      %v767 = vadd.f32 %v766, %v736
      %v768 = vadd.f32 %v767, %v737
      %v769 = vadd.f32 %v768, %v738
      %v770 = vadd.f32 %v769, %v739
      %v771 = vadd.f32 %v770, %v740
      %v772 = vadd.f32 %v771, %v741
      %v773 = vadd.f32 %v772, %v742
      %v774 = vadd.f32 %v773, %v743
      %v775 = vadd.f32 %v774, %v744
      %v776 = vadd.f32 %v775, %v745
      %v777 = vadd.f32 %v776, %v746
      %v778 = vadd.f32 %v777, %v747
      %v779 = vadd.f32 %v778, %v748
      %v780 = vadd.f32 %v779, %v749
      %v781 = vadd.f32 %v780, %v750
      %v782 = vadd.f32 %v781, %v751
      %v783 = vadd.f32 %v782, %v752
      %v784 = vadd.f32 %v783, %v753
      %v785 = vadd.f32 %v784, %v754
      %v786 = vadd.f32 %v785, %v755
      %v787 = vadd.f32 %v786, %v756
      %v788 = vadd.f32 %v787, %v757
      %v789 = vadd.f32 %v788, %v758
      %v790 = vadd.f32 %v789, %v759
      %v791 = vadd.f32 %v790, %v760
      %v792 = vadd.f32 %v791, %v761
      %v793 = vadd.f32 %v792, %v762
      %v794 = vadd.f32 %v793, %v763
      %v795 = vadd.f32 %v794, %v764
      %v796 = vrot.slane %v795, 4
      %v797 = vadd.f32 %v795, %v796
      %v798 = vrot.slane %v797, 2
      %v799 = vadd.f32 %v797, %v798
      %v800 = vrot.slane %v799, 1
      %v801 = vadd.f32 %v799, %v800
      %vm802 = vcmask 1040384
      %v803 = vsel %vm802, %v732, %v801
      %804 = vst [vmem:[%s181] sm:$0x3] %v803
      %p805 = scmp.lt.s32.totalorder %s15, 1
      %s806 = scalar_select %p805, %s15, 1
      %s807 = smul.addr %s806, 32
      %s808 = smul.addr %s807, 4
      %s809 = scalar_lea.vmem %s2, %s808
      %p810 = scmp.lt.s32.totalorder %s15, 1
      %s811 = scalar_select %p810, %s15, 1
      %s812 = smul.addr %s811, 2
      %s813 = scalar_lea.vmem %s3, %s812
      // Predicated region
      $region29: #{conv_block.2} parent=27 // pred_check
        %p814 = pneg %p80
      $region30: #{conv_block.2} parent=27 // pred_check_branch
        %816 = sbr.rel (%p814) target = $region32
      $region31: #{conv_block.2} parent=27 // pred_region
        _
      $region32: #{conv_block.2} parent=27 // pred_fallthru
        _
      // Predicated region
      $region33: #{conv_block.2} parent=27 // pred_check
        %p817 = pneg %p106
      $region34: #{conv_block.2} parent=27 // pred_check_branch
        %819 = sbr.rel (%p817) target = $region36
      $region35: #{conv_block.2} parent=27 // pred_region
        _
      $region36: #{conv_block.2} parent=27 // pred_fallthru
        _
    $region28: #{conv_block.2} parent=5 // pred_fallthru
      _
    %p820 = scmp.le.s32.totalorder 2, %s10
    // Predicated region
    $region37: #{conv_block.2} parent=5 // pred_check
      %p821 = pneg %p820
    $region38: #{conv_block.2} parent=5 // pred_check_branch
      %823 = sbr.rel (%p821) target = $region40
    $region39: #{conv_block.2} parent=5 // pred_region
      %s824 = ssub.s32 %s10, 2
      // Predicated region
      $region41: #{conv_block.2} parent=39 // pred_check
        %p825 = pneg %p86
      $region42: #{conv_block.2} parent=39 // pred_check_branch
        %827 = sbr.rel (%p825) target = $region44
      $region43: #{conv_block.2} parent=39 // pred_region
        %p828 = scmp.lt.s32.totalorder %s16, 1
        %s829 = scalar_select %p828, %s16, 1
        %s830 = smul.addr %s829, 32
        %s831 = smul.addr %s830, 4
        %s832 = scalar_lea.vmem %s2, %s831
      $region44: #{conv_block.2} parent=39 // pred_fallthru
        _
      // Predicated region
      $region45: #{conv_block.2} parent=39 // pred_check
        %p833 = pneg %p112
      $region46: #{conv_block.2} parent=39 // pred_check_branch
        %835 = sbr.rel (%p833) target = $region48
      $region47: #{conv_block.2} parent=39 // pred_region
        %p836 = scmp.lt.s32.totalorder %s16, 1
        %s837 = scalar_select %p836, %s16, 1
        %s838 = smul.addr %s837, 2
        %s839 = scalar_lea.vmem %s3, %s838
      $region48: #{conv_block.2} parent=39 // pred_fallthru
        _
    $region40: #{conv_block.2} parent=5 // pred_fallthru
      _
  $region6: #{conv_block.2} parent=0 // loop_footer
    %s14 = sadd.s32 1, %s10
  $region7: #{conv_block.2} parent=0 // loop_footer_branch
    %9 = sbr.rel target = $region3
  $region8: #{conv_block.2} parent=0 // loop_exit
    _

</llo_original>
